<compile_context>
chip_gen: v7x
topology: tpu7x:2x2x1
jax: 0.10.0
libtpu: 0.0.40
codegen_flags: <defaults>
</compile_context>

<pallas_src>
import jax
import jax.numpy as jnp
from jax.experimental import pallas as pl
from jax.experimental.pallas import tpu as pltpu

LANE = 128      # TPU lane width: pad the tiny action dim up to this
SUBLANE = 8     # sublane granularity for the batch tile


def _round_up(x, m):
    return (x + m - 1) // m * m


def dqn_kernel(x_ref, w1_ref, b1_ref, w2_ref, b2_ref,
               w3_ref, b3_ref, w4_ref, b4_ref, out_ref):
    """Fused 4-layer MLP on one batch tile.

    bf16 operands feed the MXU, accumulation is f32
    (preferred_element_type), bias-add + ReLU run on the VPU in f32.
    """
    x = x_ref[...]                                                  # (TM, S) bf16

    h = jnp.dot(x, w1_ref[...], preferred_element_type=jnp.float32) + b1_ref[...]
    h = jnp.maximum(h, 0.0).astype(jnp.bfloat16)

    h = jnp.dot(h, w2_ref[...], preferred_element_type=jnp.float32) + b2_ref[...]
    h = jnp.maximum(h, 0.0).astype(jnp.bfloat16)

    h = jnp.dot(h, w3_ref[...], preferred_element_type=jnp.float32) + b3_ref[...]
    h = jnp.maximum(h, 0.0).astype(jnp.bfloat16)

    q = jnp.dot(h, w4_ref[...], preferred_element_type=jnp.float32) + b4_ref[...]
    out_ref[...] = q.astype(out_ref.dtype)                          # (TM, 128) lane-dense


def dqn_forward(state, kparams, action_size, *, tm=256):
    """Run the DQN forward pass.

    state:       (batch, state_size) float32
    kparams:     kernel-ready params from prepare_kernel_params()
                 (bf16 weights (in,out); f32 biases (1,out); layer-4 padded to 128 lanes)
    action_size: number of valid output columns
    tm:          batch tile (multiple of 256 is ideal on v6e/v7x; clamped for tiny batches)
    returns (batch, action_size) float32 Q-values
    """
    batch, state_size = state.shape

    # Batch tile: multiple of 8 sublanes, no larger than the padded batch.
    tm = max(SUBLANE, min(tm, _round_up(batch, SUBLANE)))
    padded_batch = _round_up(batch, tm)

    x = state.astype(jnp.bfloat16)                 # halve activation DMA bytes
    if padded_batch != batch:
        x = jnp.pad(x, ((0, padded_batch - batch), (0, 0)))

    w1, b1 = kparams["w1"], kparams["b1"]
    w2, b2 = kparams["w2"], kparams["b2"]
    w3, b3 = kparams["w3"], kparams["b3"]
    w4, b4 = kparams["w4"], kparams["b4"]
    out_pad = w4.shape[1]

    def resident(a):
        # Full-array block with a constant block index: fetched once, kept in
        # VMEM for every grid step (weights/biases are tiny, ~160 KB total).
        return pl.BlockSpec(a.shape, lambda i: (0,) * a.ndim)

    grid = (padded_batch // tm,)

    out = pl.pallas_call(
        dqn_kernel,
        out_shape=jax.ShapeDtypeStruct((padded_batch, out_pad), jnp.float32),
        grid=grid,
        in_specs=[pl.BlockSpec((tm, state_size), lambda i: (i, 0)),
                  resident(w1), resident(b1),
                  resident(w2), resident(b2),
                  resident(w3), resident(b3),
                  resident(w4), resident(b4)],
        out_specs=pl.BlockSpec((tm, out_pad), lambda i: (i, 0)),
        compiler_params=pltpu.CompilerParams(
            dimension_semantics=("parallel",)),    # shards batch tiles across TCs on v7x
    )(x, w1, b1, w2, b2, w3, b3, w4, b4)

    return out[:batch, :action_size]


def init_params(key, state_size, action_size):
    """f32 parameters matching the PyTorch module (weights stored transposed (in,out),
    biases (1,out)); uniform(-1/sqrt(fan_in), 1/sqrt(fan_in)) like nn.Linear."""
    dims = [state_size, 512, 128, 32, action_size]
    params = {}
    keys = jax.random.split(key, 8)
    for i in range(4):
        fan_in, fan_out = dims[i], dims[i + 1]
        bound = 1.0 / jnp.sqrt(jnp.float32(fan_in))
        params[f"w{i+1}"] = jax.random.uniform(
            keys[2 * i], (fan_in, fan_out), jnp.float32, -bound, bound)
        params[f"b{i+1}"] = jax.random.uniform(
            keys[2 * i + 1], (1, fan_out), jnp.float32, -bound, bound)
    return params


def prepare_kernel_params(params_f32):
    """bf16 weights for the MXU + zero-pad the final layer to a lane-dense width."""
    kp = {}
    for i in (1, 2, 3):
        kp[f"w{i}"] = params_f32[f"w{i}"].astype(jnp.bfloat16)
        kp[f"b{i}"] = params_f32[f"b{i}"]            # biases stay f32 (VPU math in f32)
    w4, b4 = params_f32["w4"], params_f32["b4"]
    action_size = w4.shape[1]
    out_pad = _round_up(action_size, LANE)
    pad = out_pad - action_size
    kp["w4"] = jnp.pad(w4, ((0, 0), (0, pad))).astype(jnp.bfloat16)
    kp["b4"] = jnp.pad(b4, ((0, 0), (0, pad)))
    return kp


def dqn_reference(state, params_f32):
    """Plain-JAX f32 reference mirroring the PyTorch forward."""
    h = jnp.maximum(state @ params_f32["w1"] + params_f32["b1"], 0.0)
    h = jnp.maximum(h @ params_f32["w2"] + params_f32["b2"], 0.0)
    h = jnp.maximum(h @ params_f32["w3"] + params_f32["b3"], 0.0)
    return h @ params_f32["w4"] + params_f32["b4"]


if __name__ == "__main__":
    key = jax.random.PRNGKey(0)
    k_param, k_state = jax.random.split(key)

    batch = 8
    state_size = 16
    action_size = 4

    params = init_params(k_param, state_size, action_size)
    kparams = prepare_kernel_params(params)
    state = jax.random.normal(k_state, (batch, state_size), jnp.float32)

    q_values = dqn_forward(state, kparams, action_size)
    q_values = jax.block_until_ready(q_values)

    ref = dqn_reference(state, params)
    assert q_values.shape == (batch, action_size)
    # bf16 MXU operands (f32 accumulation) -> looser tolerance than pure f32.
    assert jnp.allclose(q_values, ref, atol=3e-2, rtol=3e-2), \
        float(jnp.max(jnp.abs(q_values - ref)))

    print("KERNEL_OK")
</pallas_src>

<mosaic_0001>
module attributes {stable_mosaic.version = 11 : i64} {
  func.func @dqn_kernel(%arg0: i32, %arg1: memref<8x16xbf16, #tpu.memory_space<vmem>>, %arg2: memref<16x512xbf16, #tpu.memory_space<vmem>>, %arg3: memref<1x512xf32, #tpu.memory_space<vmem>>, %arg4: memref<512x128xbf16, #tpu.memory_space<vmem>>, %arg5: memref<1x128xf32, #tpu.memory_space<vmem>>, %arg6: memref<128x32xbf16, #tpu.memory_space<vmem>>, %arg7: memref<1x32xf32, #tpu.memory_space<vmem>>, %arg8: memref<32x128xbf16, #tpu.memory_space<vmem>>, %arg9: memref<1x128xf32, #tpu.memory_space<vmem>>, %arg10: memref<8x128xf32, #tpu.memory_space<vmem>>) attributes {dimension_semantics = [#tpu.dimension_semantics<parallel>], iteration_bounds = array<i64: 1>, scalar_prefetch = 0 : i64, scratch_operands = 0 : i64, tpu.core_type = #tpu.core_type<tc>, window_params = [{transform_indices = @transform_0, window_bounds = array<i64: 8, 16>}, {pipeline_mode = #tpu.pipeline_mode<synchronous>, transform_indices = @transform_1, window_bounds = array<i64: 16, 512>}, {pipeline_mode = #tpu.pipeline_mode<synchronous>, transform_indices = @transform_2, window_bounds = array<i64: 1, 512>}, {pipeline_mode = #tpu.pipeline_mode<synchronous>, transform_indices = @transform_3, window_bounds = array<i64: 512, 128>}, {pipeline_mode = #tpu.pipeline_mode<synchronous>, transform_indices = @transform_4, window_bounds = array<i64: 1, 128>}, {pipeline_mode = #tpu.pipeline_mode<synchronous>, transform_indices = @transform_5, window_bounds = array<i64: 128, 32>}, {pipeline_mode = #tpu.pipeline_mode<synchronous>, transform_indices = @transform_6, window_bounds = array<i64: 1, 32>}, {pipeline_mode = #tpu.pipeline_mode<synchronous>, transform_indices = @transform_7, window_bounds = array<i64: 32, 128>}, {pipeline_mode = #tpu.pipeline_mode<synchronous>, transform_indices = @transform_8, window_bounds = array<i64: 1, 128>}, {transform_indices = @transform_9, window_bounds = array<i64: 8, 128>}]} {
    %c0 = arith.constant 0 : index
    %c0_0 = arith.constant 0 : index
    %0 = vector.load %arg1[%c0, %c0_0] : memref<8x16xbf16, #tpu.memory_space<vmem>>, vector<8x16xbf16>
    %c0_1 = arith.constant 0 : index
    %c0_2 = arith.constant 0 : index
    %1 = vector.load %arg2[%c0_1, %c0_2] : memref<16x512xbf16, #tpu.memory_space<vmem>>, vector<16x512xbf16>
    %cst = arith.constant dense<0.000000e+00> : vector<8x512xf32>
    %2 = tpu.matmul %0, %1, %cst {dimension_numbers = #tpu.dot_dimension_numbers<[1], [0], [0], [1], [0, 0, 1, 1], [], []>} : vector<8x16xbf16>, vector<16x512xbf16>, vector<8x512xf32> -> vector<8x512xf32>
    %c0_3 = arith.constant 0 : index
    %c0_4 = arith.constant 0 : index
    %3 = vector.load %arg3[%c0_3, %c0_4] : memref<1x512xf32, #tpu.memory_space<vmem>>, vector<1x512xf32>
    %4 = vector.broadcast %3 : vector<1x512xf32> to vector<8x512xf32>
    %5 = arith.addf %2, %4 : vector<8x512xf32>
    %cst_5 = arith.constant 0.000000e+00 : f32
    %6 = vector.broadcast %cst_5 : f32 to vector<8x512xf32>
    %7 = arith.maximumf %5, %6 : vector<8x512xf32>
    %8 = arith.truncf %7 : vector<8x512xf32> to vector<8x512xbf16>
    %c0_6 = arith.constant 0 : index
    %c0_7 = arith.constant 0 : index
    %9 = vector.load %arg4[%c0_6, %c0_7] : memref<512x128xbf16, #tpu.memory_space<vmem>>, vector<512x128xbf16>
    %cst_8 = arith.constant dense<0.000000e+00> : vector<8x128xf32>
    %10 = tpu.matmul %8, %9, %cst_8 {dimension_numbers = #tpu.dot_dimension_numbers<[1], [0], [0], [1], [0, 0, 1, 1], [], []>} : vector<8x512xbf16>, vector<512x128xbf16>, vector<8x128xf32> -> vector<8x128xf32>
    %c0_9 = arith.constant 0 : index
    %c0_10 = arith.constant 0 : index
    %11 = vector.load %arg5[%c0_9, %c0_10] : memref<1x128xf32, #tpu.memory_space<vmem>>, vector<1x128xf32>
    %12 = vector.broadcast %11 : vector<1x128xf32> to vector<8x128xf32>
    %13 = arith.addf %10, %12 : vector<8x128xf32>
    %cst_11 = arith.constant 0.000000e+00 : f32
    %14 = vector.broadcast %cst_11 : f32 to vector<8x128xf32>
    %15 = arith.maximumf %13, %14 : vector<8x128xf32>
    %16 = arith.truncf %15 : vector<8x128xf32> to vector<8x128xbf16>
    %c0_12 = arith.constant 0 : index
    %c0_13 = arith.constant 0 : index
    %17 = vector.load %arg6[%c0_12, %c0_13] : memref<128x32xbf16, #tpu.memory_space<vmem>>, vector<128x32xbf16>
    %cst_14 = arith.constant dense<0.000000e+00> : vector<8x32xf32>
    %18 = tpu.matmul %16, %17, %cst_14 {dimension_numbers = #tpu.dot_dimension_numbers<[1], [0], [0], [1], [0, 0, 1, 1], [], []>} : vector<8x128xbf16>, vector<128x32xbf16>, vector<8x32xf32> -> vector<8x32xf32>
    %c0_15 = arith.constant 0 : index
    %c0_16 = arith.constant 0 : index
    %19 = vector.load %arg7[%c0_15, %c0_16] : memref<1x32xf32, #tpu.memory_space<vmem>>, vector<1x32xf32>
    %20 = vector.broadcast %19 : vector<1x32xf32> to vector<8x32xf32>
    %21 = arith.addf %18, %20 : vector<8x32xf32>
    %cst_17 = arith.constant 0.000000e+00 : f32
    %22 = vector.broadcast %cst_17 : f32 to vector<8x32xf32>
    %23 = arith.maximumf %21, %22 : vector<8x32xf32>
    %24 = arith.truncf %23 : vector<8x32xf32> to vector<8x32xbf16>
    %c0_18 = arith.constant 0 : index
    %c0_19 = arith.constant 0 : index
    %25 = vector.load %arg8[%c0_18, %c0_19] : memref<32x128xbf16, #tpu.memory_space<vmem>>, vector<32x128xbf16>
    %cst_20 = arith.constant dense<0.000000e+00> : vector<8x128xf32>
    %26 = tpu.matmul %24, %25, %cst_20 {dimension_numbers = #tpu.dot_dimension_numbers<[1], [0], [0], [1], [0, 0, 1, 1], [], []>} : vector<8x32xbf16>, vector<32x128xbf16>, vector<8x128xf32> -> vector<8x128xf32>
    %c0_21 = arith.constant 0 : index
    %c0_22 = arith.constant 0 : index
    %27 = vector.load %arg9[%c0_21, %c0_22] : memref<1x128xf32, #tpu.memory_space<vmem>>, vector<1x128xf32>
    %28 = vector.broadcast %27 : vector<1x128xf32> to vector<8x128xf32>
    %29 = arith.addf %26, %28 : vector<8x128xf32>
    %c0_23 = arith.constant 0 : index
    %c0_24 = arith.constant 0 : index
    %30 = vector.load %arg10[%c0_23, %c0_24] : memref<8x128xf32, #tpu.memory_space<vmem>>, vector<8x128xf32>
    tpu.vector_store %arg10[%c0_23, %c0_24], %29 {strides = array<i32>} : memref<8x128xf32, #tpu.memory_space<vmem>>, vector<8x128xf32>,
    return
  }
  func.func @transform_0(%arg0: i32) -> (i32, i32) {
    %c0_i32 = arith.constant 0 : i32
    %c0_i32_0 = arith.constant 0 : i32
    return %arg0, %c0_i32 : i32, i32
  }
  func.func @transform_1(%arg0: i32) -> (i32, i32) {
    %c0_i32 = arith.constant 0 : i32
    %c0_i32_0 = arith.constant 0 : i32
    %c0_i32_1 = arith.constant 0 : i32
    return %c0_i32, %c0_i32_0 : i32, i32
  }
  func.func @transform_2(%arg0: i32) -> (i32, i32) {
    %c0_i32 = arith.constant 0 : i32
    %c0_i32_0 = arith.constant 0 : i32
    %c0_i32_1 = arith.constant 0 : i32
    return %c0_i32, %c0_i32_0 : i32, i32
  }
  func.func @transform_3(%arg0: i32) -> (i32, i32) {
    %c0_i32 = arith.constant 0 : i32
    %c0_i32_0 = arith.constant 0 : i32
    %c0_i32_1 = arith.constant 0 : i32
    return %c0_i32, %c0_i32_0 : i32, i32
  }
  func.func @transform_4(%arg0: i32) -> (i32, i32) {
    %c0_i32 = arith.constant 0 : i32
    %c0_i32_0 = arith.constant 0 : i32
    %c0_i32_1 = arith.constant 0 : i32
    return %c0_i32, %c0_i32_0 : i32, i32
  }
  func.func @transform_5(%arg0: i32) -> (i32, i32) {
    %c0_i32 = arith.constant 0 : i32
    %c0_i32_0 = arith.constant 0 : i32
    %c0_i32_1 = arith.constant 0 : i32
    return %c0_i32, %c0_i32_0 : i32, i32
  }
  func.func @transform_6(%arg0: i32) -> (i32, i32) {
    %c0_i32 = arith.constant 0 : i32
    %c0_i32_0 = arith.constant 0 : i32
    %c0_i32_1 = arith.constant 0 : i32
    return %c0_i32, %c0_i32_0 : i32, i32
  }
  func.func @transform_7(%arg0: i32) -> (i32, i32) {
    %c0_i32 = arith.constant 0 : i32
    %c0_i32_0 = arith.constant 0 : i32
    %c0_i32_1 = arith.constant 0 : i32
    return %c0_i32, %c0_i32_0 : i32, i32
  }
  func.func @transform_8(%arg0: i32) -> (i32, i32) {
    %c0_i32 = arith.constant 0 : i32
    %c0_i32_0 = arith.constant 0 : i32
    %c0_i32_1 = arith.constant 0 : i32
    return %c0_i32, %c0_i32_0 : i32, i32
  }
  func.func @transform_9(%arg0: i32) -> (i32, i32) {
    %c0_i32 = arith.constant 0 : i32
    %c0_i32_0 = arith.constant 0 : i32
    return %arg0, %c0_i32 : i32, i32
  }
}

</mosaic_0001>

<llo_original>
// kernel: tpu_custom_call.1
$region0: #{tpu_custom_call.1}
  #allocation0 [shape = 'u32[]', space=smem, size = 0x4, offset = 0x4, fixed_abs, tag = 'smem constant byte address 0x4 - core index']
  #allocation1 [shape = 'u32[144,128]{1,0:T(1,128)}', space=vmem, size = 0x12000, scoped, tag = 'internal scratch']
  %s0 = inlined_call_operand.vmem [shape: bf16[8,16], index: 0, kind: input, shape index: {}]
  %s1 = inlined_call_operand.vmem [shape: bf16[16,512], index: 1, kind: input, shape index: {}]
  %s2 = inlined_call_operand.vmem [shape: f32[1,512], index: 2, kind: input, shape index: {}]
  %s3 = inlined_call_operand.hbm [shape: bf16[512,128], index: 3, kind: input, shape index: {}]
  %s4 = inlined_call_operand.vmem [shape: f32[1,128], index: 4, kind: input, shape index: {}]
  %s5 = inlined_call_operand.vmem [shape: bf16[128,32], index: 5, kind: input, shape index: {}]
  %s6 = inlined_call_operand.vmem [shape: f32[1,32], index: 6, kind: input, shape index: {}]
  %s7 = inlined_call_operand.vmem [shape: bf16[32,128], index: 7, kind: input, shape index: {}]
  %s8 = inlined_call_operand.vmem [shape: f32[1,128], index: 8, kind: input, shape index: {}]
  %s9 = inlined_call_operand.hbm [shape: f32[8,128], index: 9, kind: output, shape index: {}]
  %s10 = sld [smem:[#allocation0]]
  $region50: #{tpu_custom_call.1} parent=0
    _
  %s12 = ssub.s32 1, %s10
  %s13 = scalar_select 0, %s12, %s10
  $region1: #{tpu_custom_call.1} parent=0
    #allocation2 [shape = 'u8[131072]{0}', space=vmem, size = 0x20000, scoped, tag = 'input window, operand 3, single buffered']
    #allocation3 [shape = 's32[1]{0}', space=sflag, size = 0x4, scoped, tag = 'scoped memory for tpu_custom_call.1']
    #allocation4 [shape = 's32[1]{0}', space=sflag, size = 0x4, scoped, tag = 'scoped memory for tpu_custom_call.1']
    #allocation5 [shape = 'u8[4096]{0}', space=vmem, size = 0x1000, scoped, tag = 'output window, operand 0, single buffered']
    %14 = vsyncpa [#allocation3], 0
    %15 = vsyncpa [#allocation4], 0
    // Predicated region
    $region2: #{tpu_custom_call.1} parent=1 // pred_check
      _
    $region3: #{tpu_custom_call.1} parent=1 // pred_check_branch
      %17 = sbr.rel (0) target = $region5
    $region4: #{tpu_custom_call.1} parent=1 // pred_region
      _
    $region5: #{tpu_custom_call.1} parent=1 // pred_fallthru
      _
    // Predicated region
    $region6: #{tpu_custom_call.1} parent=1 // pred_check
      _
    $region7: #{tpu_custom_call.1} parent=1 // pred_check_branch
      %19 = sbr.rel (0) target = $region9
    $region8: #{tpu_custom_call.1} parent=1 // pred_region
      _
    $region9: #{tpu_custom_call.1} parent=1 // pred_fallthru
      _
    // Predicated region
    $region10: #{tpu_custom_call.1} parent=1 // pred_check
      _
    $region11: #{tpu_custom_call.1} parent=1 // pred_check_branch
      %21 = sbr.rel (0) target = $region13
    $region12: #{tpu_custom_call.1} parent=1 // pred_region
      _
    $region13: #{tpu_custom_call.1} parent=1 // pred_fallthru
      _
    // Predicated region
    $region14: #{tpu_custom_call.1} parent=1 // pred_check
      _
    $region15: #{tpu_custom_call.1} parent=1 // pred_check_branch
      %23 = sbr.rel (0) target = $region17
    $region16: #{tpu_custom_call.1} parent=1 // pred_region
      %s25 = ssub.s32 4096, 4096
      %26 = vsyncadd [#allocation3], %s25
      %s27 = sshll.u32 [#allocation2], 4
      %s28 = int_to_ptr.vmem [resolvable:$true] %s27
      %33 = dma.hbm_to_vmem [thread:$0]  %s3, 4096, %s28, [#allocation3], 64, 64, 4
    $region17: #{tpu_custom_call.1} parent=1 // pred_fallthru
      _
    // Predicated region
    $region18: #{tpu_custom_call.1} parent=1 // pred_check
      _
    $region19: #{tpu_custom_call.1} parent=1 // pred_check_branch
      %35 = sbr.rel (0) target = $region21
    $region20: #{tpu_custom_call.1} parent=1 // pred_region
      _
    $region21: #{tpu_custom_call.1} parent=1 // pred_fallthru
      _
    // Predicated region
    $region22: #{tpu_custom_call.1} parent=1 // pred_check
      _
    $region23: #{tpu_custom_call.1} parent=1 // pred_check_branch
      %37 = sbr.rel (0) target = $region25
    $region24: #{tpu_custom_call.1} parent=1 // pred_region
      _
    $region25: #{tpu_custom_call.1} parent=1 // pred_fallthru
      _
    // Predicated region
    $region26: #{tpu_custom_call.1} parent=1 // pred_check
      _
    $region27: #{tpu_custom_call.1} parent=1 // pred_check_branch
      %39 = sbr.rel (0) target = $region29
    $region28: #{tpu_custom_call.1} parent=1 // pred_region
      _
    $region29: #{tpu_custom_call.1} parent=1 // pred_fallthru
      _
    // Predicated region
    $region30: #{tpu_custom_call.1} parent=1 // pred_check
      _
    $region31: #{tpu_custom_call.1} parent=1 // pred_check_branch
      %41 = sbr.rel (0) target = $region33
    $region32: #{tpu_custom_call.1} parent=1 // pred_region
      _
    $region33: #{tpu_custom_call.1} parent=1 // pred_fallthru
      _
    // Predicated region
    $region34: #{tpu_custom_call.1} parent=1 // pred_check
      _
    $region35: #{tpu_custom_call.1} parent=1 // pred_check_branch
      %43 = sbr.rel (0) target = $region37
    $region36: #{tpu_custom_call.1} parent=1 // pred_region
      _
    $region37: #{tpu_custom_call.1} parent=1 // pred_fallthru
      _
    // Predicated region
    $region38: #{tpu_custom_call.1} parent=1 // pred_check
      _
    $region39: #{tpu_custom_call.1} parent=1 // pred_check_branch
      %45 = sbr.rel (0) target = $region41
    $region40: #{tpu_custom_call.1} parent=1 // pred_region
      %46 = dma.done [#allocation3], 4096
    $region41: #{tpu_custom_call.1} parent=1 // pred_fallthru
      _
    %v48 = vld [vmem:[%s0] sm:$0xf]
    %v49 = vld [vmem:[%s1] sm:$0xff]
    %v50 = vld [vmem:[%s1 + $0x8] sm:$0xff]
    %v51 = vld [vmem:[%s1 + $0x10] sm:$0xff]
    %v52 = vld [vmem:[%s1 + $0x18] sm:$0xff]
    %v53 = vld [vmem:[%s2] sm:$0xf]
    %v55 = vlaneseq
    %v56 = vshrl.u32 %v55, 7
    %v57 = vsub.s32 0, %v56
    %v58 = vrot.slane %v53, %v57
    %v59 = vlaneseq
    %v60 = vshrl.u32 %v59, 7
    %v61 = vsub.s32 1, %v60
    %v62 = vrot.slane %v53, %v61
    %v63 = vlaneseq
    %v64 = vshrl.u32 %v63, 7
    %v65 = vsub.s32 2, %v64
    %v66 = vrot.slane %v53, %v65
    %v67 = vlaneseq
    %v68 = vshrl.u32 %v67, 7
    %v69 = vsub.s32 3, %v68
    %v70 = vrot.slane %v53, %v69
    %v79 = vunpack.c.l.b16 %v49
    %v80 = vunpack.c.h.b16 %v49
    %v81 = vunpack.c.l.b16 %v50
    %v82 = vunpack.c.h.b16 %v50
    %v83 = vunpack.c.l.b16 %v51
    %v84 = vunpack.c.h.b16 %v51
    %v85 = vunpack.c.l.b16 %v52
    %v86 = vunpack.c.h.b16 %v52
    %v87 = vpack.c.b16 %v83, %v79
    %v88 = vpack.c.b16 %v84, %v80
    %v89 = vpack.c.b16 %v85, %v81
    %v90 = vpack.c.b16 %v86, %v82
    %vm95 = vcmask 130048
    %v97 = vsel %vm95, %v48, 0
    %99 = vmatprep.subr.bf16.mxu0 %v88
    %100 = vmatpush1.bf16.msra.mxu0 %v87
    %101 = vmatprep.subr.bf16.mxu0 0
    %102 = vmatpush1.bf16.msra.mxu0 0
    %103 = vmatprep.subr.bf16.mxu0 0
    %104 = vmatpush1.bf16.msra.mxu0 0
    %105 = vmatprep.subr.bf16.mxu0 0
    %106 = vmatpush1.bf16.msra.mxu0 0
    %107 = vmatprep.subr.bf16.mxu0 0
    %108 = vmatpush1.bf16.msra.mxu0 0
    %109 = vmatprep.subr.bf16.mxu0 0
    %110 = vmatpush1.bf16.msra.mxu0 0
    %111 = vmatprep.subr.bf16.mxu0 0
    %112 = vmatpush1.bf16.msra.mxu0 0
    %113 = vmatprep.subr.bf16.mxu0 0
    %114 = vmatpush1.bf16.msra.mxu0 0
    %115 = vmatprep.subr.bf16.mxu0 0
    %116 = vmatpush1.bf16.msra.mxu0 0
    %117 = vmatprep.subr.bf16.mxu0 0
    %118 = vmatpush1.bf16.msra.mxu0 0
    %119 = vmatprep.subr.bf16.mxu0 0
    %120 = vmatpush1.bf16.msra.mxu0 0
    %121 = vmatprep.subr.bf16.mxu0 0
    %122 = vmatpush1.bf16.msra.mxu0 0
    %123 = vmatprep.subr.bf16.mxu0 0
    %124 = vmatpush1.bf16.msra.mxu0 0
    %125 = vmatprep.subr.bf16.mxu0 0
    %126 = vmatpush1.bf16.msra.mxu0 0
    %127 = vmatprep.subr.bf16.mxu0 0
    %128 = vmatpush1.bf16.msra.mxu0 0
    %129 = vmatprep.subr.bf16.mxu0 0
    %130 = vmatpush1.bf16.msra.mxu0 0
    %131 = vmatprep.mubr.bf16.mxu0 0
    %132 = vmatmul.mubr.bf16.gmra.mrb[0].mxu0 %v97
    %v133 = vpop.f32.mrb[0].mxu0
    %v134 = vadd.f32 %v58, %v133
    %v135 = vpop.f32.mrb[0].mxu0
    %v136 = vadd.f32 %v62, %v135
    %v137 = vpop.f32.mrb[0].mxu0
    %v138 = vpop.f32.mrb[0].mxu0
    %139 = vdwg.mxu0
    %140 = vmatprep.subr.bf16.mxu0 %v90
    %141 = vmatpush1.bf16.msra.mxu0 %v89
    %142 = vmatprep.subr.bf16.mxu0 0
    %143 = vmatpush1.bf16.msra.mxu0 0
    %144 = vmatprep.subr.bf16.mxu0 0
    %145 = vmatpush1.bf16.msra.mxu0 0
    %146 = vmatprep.subr.bf16.mxu0 0
    %147 = vmatpush1.bf16.msra.mxu0 0
    %148 = vmatprep.subr.bf16.mxu0 0
    %149 = vmatpush1.bf16.msra.mxu0 0
    %150 = vmatprep.subr.bf16.mxu0 0
    %151 = vmatpush1.bf16.msra.mxu0 0
    %152 = vmatprep.subr.bf16.mxu0 0
    %153 = vmatpush1.bf16.msra.mxu0 0
    %154 = vmatprep.subr.bf16.mxu0 0
    %155 = vmatpush1.bf16.msra.mxu0 0
    %156 = vmatprep.subr.bf16.mxu0 0
    %157 = vmatpush1.bf16.msra.mxu0 0
    %158 = vmatprep.subr.bf16.mxu0 0
    %159 = vmatpush1.bf16.msra.mxu0 0
    %160 = vmatprep.subr.bf16.mxu0 0
    %161 = vmatpush1.bf16.msra.mxu0 0
    %162 = vmatprep.subr.bf16.mxu0 0
    %163 = vmatpush1.bf16.msra.mxu0 0
    %164 = vmatprep.subr.bf16.mxu0 0
    %165 = vmatpush1.bf16.msra.mxu0 0
    %166 = vmatprep.subr.bf16.mxu0 0
    %167 = vmatpush1.bf16.msra.mxu0 0
    %168 = vmatprep.subr.bf16.mxu0 0
    %169 = vmatpush1.bf16.msra.mxu0 0
    %170 = vmatprep.subr.bf16.mxu0 0
    %171 = vmatpush1.bf16.msra.mxu0 0
    %172 = vmatprep.mubr.bf16.mxu0 0
    %173 = vmatmul.mubr.bf16.gmra.mrb[0].mxu0 %v97
    %v174 = vpop.f32.mrb[0].mxu0
    %v175 = vadd.f32 %v66, %v174
    %v176 = vpop.f32.mrb[0].mxu0
    %v177 = vadd.f32 %v70, %v176
    %v178 = vpop.f32.mrb[0].mxu0
    %v179 = vpop.f32.mrb[0].mxu0
    %180 = vdwg.mxu0
    %v181 = vmax.f32 %v134, 0.0
    %v182 = vmax.f32 %v136, 0.0
    %v183 = vmax.f32 %v175, 0.0
    %v184 = vmax.f32 %v177, 0.0
    %v185 = vpack.c.bf16 %v181, %v181
    %v186 = vpack.c.bf16 %v182, %v182
    %v187 = vpack.c.bf16 %v183, %v183
    %v188 = vpack.c.bf16 %v184, %v184
    %v189 = vld [vmem:[#allocation2] sm:$0xf]
    %v190 = vld [vmem:[#allocation2 + $0x4] sm:$0xf]
    %v191 = vld [vmem:[#allocation2 + $0x8] sm:$0xf]
    %v192 = vld [vmem:[#allocation2 + $0xc] sm:$0xf]
    %v193 = vld [vmem:[#allocation2 + $0x10] sm:$0xf]
    %v194 = vld [vmem:[#allocation2 + $0x14] sm:$0xf]
    %v195 = vld [vmem:[#allocation2 + $0x18] sm:$0xf]
    %v196 = vld [vmem:[#allocation2 + $0x1c] sm:$0xf]
    %v197 = vld [vmem:[#allocation2 + $0x20] sm:$0xf]
    %v198 = vld [vmem:[#allocation2 + $0x24] sm:$0xf]
    %v199 = vld [vmem:[#allocation2 + $0x28] sm:$0xf]
    %v200 = vld [vmem:[#allocation2 + $0x2c] sm:$0xf]
    %v201 = vld [vmem:[#allocation2 + $0x30] sm:$0xf]
    %v202 = vld [vmem:[#allocation2 + $0x34] sm:$0xf]
    %v203 = vld [vmem:[#allocation2 + $0x38] sm:$0xf]
    %v204 = vld [vmem:[#allocation2 + $0x3c] sm:$0xf]
    %v205 = vld [vmem:[#allocation2 + $0x40] sm:$0xf]
    %v206 = vld [vmem:[#allocation2 + $0x44] sm:$0xf]
    %v207 = vld [vmem:[#allocation2 + $0x48] sm:$0xf]
    %v208 = vld [vmem:[#allocation2 + $0x4c] sm:$0xf]
    %v209 = vld [vmem:[#allocation2 + $0x50] sm:$0xf]
    %v210 = vld [vmem:[#allocation2 + $0x54] sm:$0xf]
    %v211 = vld [vmem:[#allocation2 + $0x58] sm:$0xf]
    %v212 = vld [vmem:[#allocation2 + $0x5c] sm:$0xf]
    %v213 = vld [vmem:[#allocation2 + $0x60] sm:$0xf]
    %v214 = vld [vmem:[#allocation2 + $0x64] sm:$0xf]
    %v215 = vld [vmem:[#allocation2 + $0x68] sm:$0xf]
    %v216 = vld [vmem:[#allocation2 + $0x6c] sm:$0xf]
    %v217 = vld [vmem:[#allocation2 + $0x70] sm:$0xf]
    %v218 = vld [vmem:[#allocation2 + $0x74] sm:$0xf]
    %v219 = vld [vmem:[#allocation2 + $0x78] sm:$0xf]
    %v220 = vld [vmem:[#allocation2 + $0x7c] sm:$0xf]
    %v221 = vld [vmem:[#allocation2 + $0x80] sm:$0xf]
    %v222 = vld [vmem:[#allocation2 + $0x84] sm:$0xf]
    %v223 = vld [vmem:[#allocation2 + $0x88] sm:$0xf]
    %v224 = vld [vmem:[#allocation2 + $0x8c] sm:$0xf]
    %v225 = vld [vmem:[#allocation2 + $0x90] sm:$0xf]
    %v226 = vld [vmem:[#allocation2 + $0x94] sm:$0xf]
    %v227 = vld [vmem:[#allocation2 + $0x98] sm:$0xf]
    %v228 = vld [vmem:[#allocation2 + $0x9c] sm:$0xf]
    %v229 = vld [vmem:[#allocation2 + $0xa0] sm:$0xf]
    %v230 = vld [vmem:[#allocation2 + $0xa4] sm:$0xf]
    %v231 = vld [vmem:[#allocation2 + $0xa8] sm:$0xf]
    %v232 = vld [vmem:[#allocation2 + $0xac] sm:$0xf]
    %v233 = vld [vmem:[#allocation2 + $0xb0] sm:$0xf]
    %v234 = vld [vmem:[#allocation2 + $0xb4] sm:$0xf]
    %v235 = vld [vmem:[#allocation2 + $0xb8] sm:$0xf]
    %v236 = vld [vmem:[#allocation2 + $0xbc] sm:$0xf]
    %v237 = vld [vmem:[#allocation2 + $0xc0] sm:$0xf]
    %v238 = vld [vmem:[#allocation2 + $0xc4] sm:$0xf]
    %v239 = vld [vmem:[#allocation2 + $0xc8] sm:$0xf]
    %v240 = vld [vmem:[#allocation2 + $0xcc] sm:$0xf]
    %v241 = vld [vmem:[#allocation2 + $0xd0] sm:$0xf]
    %v242 = vld [vmem:[#allocation2 + $0xd4] sm:$0xf]
    %v243 = vld [vmem:[#allocation2 + $0xd8] sm:$0xf]
    %v244 = vld [vmem:[#allocation2 + $0xdc] sm:$0xf]
    %v245 = vld [vmem:[#allocation2 + $0xe0] sm:$0xf]
    %v246 = vld [vmem:[#allocation2 + $0xe4] sm:$0xf]
    %v247 = vld [vmem:[#allocation2 + $0xe8] sm:$0xf]
    %v248 = vld [vmem:[#allocation2 + $0xec] sm:$0xf]
    %v249 = vld [vmem:[#allocation2 + $0xf0] sm:$0xf]
    %v250 = vld [vmem:[#allocation2 + $0xf4] sm:$0xf]
    %v251 = vld [vmem:[#allocation2 + $0xf8] sm:$0xf]
    %v252 = vld [vmem:[#allocation2 + $0xfc] sm:$0xf]
    %v253 = vld [vmem:[%s4] sm:$0x1]
    %v255 = vlaneseq
    %v256 = vshrl.u32 %v255, 7
    %v257 = vsub.s32 0, %v256
    %v258 = vrot.slane %v253, %v257
    %v324 = vunpack.c.l.b16 %v189
    %v325 = vunpack.c.l.b16 %v190
    %v326 = vunpack.c.l.b16 %v191
    %v327 = vunpack.c.l.b16 %v192
    %v328 = vunpack.c.l.b16 %v193
    %v329 = vunpack.c.l.b16 %v194
    %v330 = vunpack.c.l.b16 %v195
    %v331 = vunpack.c.l.b16 %v196
    %v332 = vunpack.c.l.b16 %v197
    %v333 = vunpack.c.l.b16 %v198
    %v334 = vunpack.c.l.b16 %v199
    %v335 = vunpack.c.l.b16 %v200
    %v336 = vunpack.c.l.b16 %v201
    %v337 = vunpack.c.l.b16 %v202
    %v338 = vunpack.c.l.b16 %v203
    %v339 = vunpack.c.l.b16 %v204
    %v340 = vunpack.c.l.b16 %v205
    %v341 = vunpack.c.l.b16 %v206
    %v342 = vunpack.c.l.b16 %v207
    %v343 = vunpack.c.l.b16 %v208
    %v344 = vunpack.c.l.b16 %v209
    %v345 = vunpack.c.l.b16 %v210
    %v346 = vunpack.c.l.b16 %v211
    %v347 = vunpack.c.l.b16 %v212
    %v348 = vunpack.c.l.b16 %v213
    %v349 = vunpack.c.l.b16 %v214
    %v350 = vunpack.c.l.b16 %v215
    %v351 = vunpack.c.l.b16 %v216
    %v352 = vunpack.c.l.b16 %v217
    %v353 = vunpack.c.l.b16 %v218
    %v354 = vunpack.c.l.b16 %v219
    %v355 = vunpack.c.l.b16 %v220
    %v356 = vunpack.c.l.b16 %v221
    %v357 = vunpack.c.l.b16 %v222
    %v358 = vunpack.c.l.b16 %v223
    %v359 = vunpack.c.l.b16 %v224
    %v360 = vunpack.c.l.b16 %v225
    %v361 = vunpack.c.l.b16 %v226
    %v362 = vunpack.c.l.b16 %v227
    %v363 = vunpack.c.l.b16 %v228
    %v364 = vunpack.c.l.b16 %v229
    %v365 = vunpack.c.l.b16 %v230
    %v366 = vunpack.c.l.b16 %v231
    %v367 = vunpack.c.l.b16 %v232
    %v368 = vunpack.c.l.b16 %v233
    %v369 = vunpack.c.l.b16 %v234
    %v370 = vunpack.c.l.b16 %v235
    %v371 = vunpack.c.l.b16 %v236
    %v372 = vunpack.c.l.b16 %v237
    %v373 = vunpack.c.l.b16 %v238
    %v374 = vunpack.c.l.b16 %v239
    %v375 = vunpack.c.l.b16 %v240
    %v376 = vunpack.c.l.b16 %v241
    %v377 = vunpack.c.l.b16 %v242
    %v378 = vunpack.c.l.b16 %v243
    %v379 = vunpack.c.l.b16 %v244
    %v380 = vunpack.c.l.b16 %v245
    %v381 = vunpack.c.l.b16 %v246
    %v382 = vunpack.c.l.b16 %v247
    %v383 = vunpack.c.l.b16 %v248
    %v384 = vunpack.c.l.b16 %v249
    %v385 = vunpack.c.l.b16 %v250
    %v386 = vunpack.c.l.b16 %v251
    %v387 = vunpack.c.l.b16 %v252
    %v388 = vpack.c.b16 %v325, %v324
    %v389 = vpack.c.b16 %v327, %v326
    %v390 = vpack.c.b16 %v329, %v328
    %v391 = vpack.c.b16 %v331, %v330
    %v392 = vpack.c.b16 %v333, %v332
    %v393 = vpack.c.b16 %v335, %v334
    %v394 = vpack.c.b16 %v337, %v336
    %v395 = vpack.c.b16 %v339, %v338
    %v396 = vpack.c.b16 %v341, %v340
    %v397 = vpack.c.b16 %v343, %v342
    %v398 = vpack.c.b16 %v345, %v344
    %v399 = vpack.c.b16 %v347, %v346
    %v400 = vpack.c.b16 %v349, %v348
    %v401 = vpack.c.b16 %v351, %v350
    %v402 = vpack.c.b16 %v353, %v352
    %v403 = vpack.c.b16 %v355, %v354
    %v404 = vpack.c.b16 %v357, %v356
    %v405 = vpack.c.b16 %v359, %v358
    %v406 = vpack.c.b16 %v361, %v360
    %v407 = vpack.c.b16 %v363, %v362
    %v408 = vpack.c.b16 %v365, %v364
    %v409 = vpack.c.b16 %v367, %v366
    %v410 = vpack.c.b16 %v369, %v368
    %v411 = vpack.c.b16 %v371, %v370
    %v412 = vpack.c.b16 %v373, %v372
    %v413 = vpack.c.b16 %v375, %v374
    %v414 = vpack.c.b16 %v377, %v376
    %v415 = vpack.c.b16 %v379, %v378
    %v416 = vpack.c.b16 %v381, %v380
    %v417 = vpack.c.b16 %v383, %v382
    %v418 = vpack.c.b16 %v385, %v384
    %v419 = vpack.c.b16 %v387, %v386
    %452 = vmatprep.subr.bf16.mxu0 0
    %453 = vmatpush1.bf16.msra.mxu0 %v388
    %454 = vmatprep.subr.bf16.mxu0 0
    %455 = vmatpush1.bf16.msra.mxu0 %v389
    %456 = vmatprep.subr.bf16.mxu0 0
    %457 = vmatpush1.bf16.msra.mxu0 %v390
    %458 = vmatprep.subr.bf16.mxu0 0
    %459 = vmatpush1.bf16.msra.mxu0 %v391
    %460 = vmatprep.subr.bf16.mxu0 0
    %461 = vmatpush1.bf16.msra.mxu0 %v392
    %462 = vmatprep.subr.bf16.mxu0 0
    %463 = vmatpush1.bf16.msra.mxu0 %v393
    %464 = vmatprep.subr.bf16.mxu0 0
    %465 = vmatpush1.bf16.msra.mxu0 %v394
    %466 = vmatprep.subr.bf16.mxu0 0
    %467 = vmatpush1.bf16.msra.mxu0 %v395
    %468 = vmatprep.subr.bf16.mxu0 0
    %469 = vmatpush1.bf16.msra.mxu0 %v396
    %470 = vmatprep.subr.bf16.mxu0 0
    %471 = vmatpush1.bf16.msra.mxu0 %v397
    %472 = vmatprep.subr.bf16.mxu0 0
    %473 = vmatpush1.bf16.msra.mxu0 %v398
    %474 = vmatprep.subr.bf16.mxu0 0
    %475 = vmatpush1.bf16.msra.mxu0 %v399
    %476 = vmatprep.subr.bf16.mxu0 0
    %477 = vmatpush1.bf16.msra.mxu0 %v400
    %478 = vmatprep.subr.bf16.mxu0 0
    %479 = vmatpush1.bf16.msra.mxu0 %v401
    %480 = vmatprep.subr.bf16.mxu0 0
    %481 = vmatpush1.bf16.msra.mxu0 %v402
    %482 = vmatprep.subr.bf16.mxu0 0
    %483 = vmatpush1.bf16.msra.mxu0 %v403
    %484 = vmatprep.mubr.bf16.mxu0 %v186
    %485 = vmatmul.mubr.bf16.gmra.mrb[0].mxu0 %v185
    %v486 = vpop.f32.mrb[0].mxu0
    %v487 = vadd.f32 %v258, %v486
    %v488 = vpop.f32.mrb[0].mxu0
    %v489 = vpop.f32.mrb[0].mxu0
    %v490 = vpop.f32.mrb[0].mxu0
    %491 = vdwg.mxu0
    %492 = vmatprep.subr.bf16.mxu0 0
    %493 = vmatpush1.bf16.msra.mxu0 %v404
    %494 = vmatprep.subr.bf16.mxu0 0
    %495 = vmatpush1.bf16.msra.mxu0 %v405
    %496 = vmatprep.subr.bf16.mxu0 0
    %497 = vmatpush1.bf16.msra.mxu0 %v406
    %498 = vmatprep.subr.bf16.mxu0 0
    %499 = vmatpush1.bf16.msra.mxu0 %v407
    %500 = vmatprep.subr.bf16.mxu0 0
    %501 = vmatpush1.bf16.msra.mxu0 %v408
    %502 = vmatprep.subr.bf16.mxu0 0
    %503 = vmatpush1.bf16.msra.mxu0 %v409
    %504 = vmatprep.subr.bf16.mxu0 0
    %505 = vmatpush1.bf16.msra.mxu0 %v410
    %506 = vmatprep.subr.bf16.mxu0 0
    %507 = vmatpush1.bf16.msra.mxu0 %v411
    %508 = vmatprep.subr.bf16.mxu0 0
    %509 = vmatpush1.bf16.msra.mxu0 %v412
    %510 = vmatprep.subr.bf16.mxu0 0
    %511 = vmatpush1.bf16.msra.mxu0 %v413
    %512 = vmatprep.subr.bf16.mxu0 0
    %513 = vmatpush1.bf16.msra.mxu0 %v414
    %514 = vmatprep.subr.bf16.mxu0 0
    %515 = vmatpush1.bf16.msra.mxu0 %v415
    %516 = vmatprep.subr.bf16.mxu0 0
    %517 = vmatpush1.bf16.msra.mxu0 %v416
    %518 = vmatprep.subr.bf16.mxu0 0
    %519 = vmatpush1.bf16.msra.mxu0 %v417
    %520 = vmatprep.subr.bf16.mxu0 0
    %521 = vmatpush1.bf16.msra.mxu0 %v418
    %522 = vmatprep.subr.bf16.mxu0 0
    %523 = vmatpush1.bf16.msra.mxu0 %v419
    %524 = vmatprep.mubr.bf16.mxu0 %v188
    %525 = vmatmul.mubr.bf16.gmra.mrb[0].mxu0 %v187
    %v526 = vpop.f32.mrb[0].mxu0
    %v527 = vadd.f32 %v487, %v526
    %v528 = vpop.f32.mrb[0].mxu0
    %v529 = vpop.f32.mrb[0].mxu0
    %v530 = vpop.f32.mrb[0].mxu0
    %531 = vdwg.mxu0
    %v532 = vmax.f32 %v527, 0.0
    %v533 = vpack.c.bf16 %v532, %v532
    %v534 = vld [vmem:[%s5] sm:$0xf]
    %v535 = vld [vmem:[%s5 + $0x4] sm:$0xf]
    %v536 = vld [vmem:[%s5 + $0x8] sm:$0xf]
    %v537 = vld [vmem:[%s5 + $0xc] sm:$0xf]
    %v538 = vld [vmem:[%s5 + $0x10] sm:$0xf]
    %v539 = vld [vmem:[%s5 + $0x14] sm:$0xf]
    %v540 = vld [vmem:[%s5 + $0x18] sm:$0xf]
    %v541 = vld [vmem:[%s5 + $0x1c] sm:$0xf]
    %v542 = vld [vmem:[%s5 + $0x20] sm:$0xf]
    %v543 = vld [vmem:[%s5 + $0x24] sm:$0xf]
    %v544 = vld [vmem:[%s5 + $0x28] sm:$0xf]
    %v545 = vld [vmem:[%s5 + $0x2c] sm:$0xf]
    %v546 = vld [vmem:[%s5 + $0x30] sm:$0xf]
    %v547 = vld [vmem:[%s5 + $0x34] sm:$0xf]
    %v548 = vld [vmem:[%s5 + $0x38] sm:$0xf]
    %v549 = vld [vmem:[%s5 + $0x3c] sm:$0xf]
    %v550 = vld [vmem:[%s6] sm:$0x1]
    %v552 = vlaneseq
    %v553 = vshrl.u32 %v552, 7
    %v554 = vsub.s32 0, %v553
    %v555 = vrot.slane %v550, %v554
    %v573 = vunpack.c.l.b16 %v534
    %v574 = vunpack.c.l.b16 %v535
    %v575 = vunpack.c.l.b16 %v536
    %v576 = vunpack.c.l.b16 %v537
    %v577 = vunpack.c.l.b16 %v538
    %v578 = vunpack.c.l.b16 %v539
    %v579 = vunpack.c.l.b16 %v540
    %v580 = vunpack.c.l.b16 %v541
    %v581 = vunpack.c.l.b16 %v542
    %v582 = vunpack.c.l.b16 %v543
    %v583 = vunpack.c.l.b16 %v544
    %v584 = vunpack.c.l.b16 %v545
    %v585 = vunpack.c.l.b16 %v546
    %v586 = vunpack.c.l.b16 %v547
    %v587 = vunpack.c.l.b16 %v548
    %v588 = vunpack.c.l.b16 %v549
    %v589 = vpack.c.b16 %v574, %v573
    %v590 = vpack.c.b16 %v576, %v575
    %v591 = vpack.c.b16 %v578, %v577
    %v592 = vpack.c.b16 %v580, %v579
    %v593 = vpack.c.b16 %v582, %v581
    %v594 = vpack.c.b16 %v584, %v583
    %v595 = vpack.c.b16 %v586, %v585
    %v596 = vpack.c.b16 %v588, %v587
    %605 = vmatprep.subr.bf16.mxu0 0
    %606 = vmatpush1.bf16.msra.mxu0 %v589
    %607 = vmatprep.subr.bf16.mxu0 0
    %608 = vmatpush1.bf16.msra.mxu0 %v590
    %609 = vmatprep.subr.bf16.mxu0 0
    %610 = vmatpush1.bf16.msra.mxu0 %v591
    %611 = vmatprep.subr.bf16.mxu0 0
    %612 = vmatpush1.bf16.msra.mxu0 %v592
    %613 = vmatprep.subr.bf16.mxu0 0
    %614 = vmatpush1.bf16.msra.mxu0 %v593
    %615 = vmatprep.subr.bf16.mxu0 0
    %616 = vmatpush1.bf16.msra.mxu0 %v594
    %617 = vmatprep.subr.bf16.mxu0 0
    %618 = vmatpush1.bf16.msra.mxu0 %v595
    %619 = vmatprep.subr.bf16.mxu0 0
    %620 = vmatpush1.bf16.msra.mxu0 %v596
    %621 = vmatprep.subr.bf16.mxu0 0
    %622 = vmatpush1.bf16.msra.mxu0 0
    %623 = vmatprep.subr.bf16.mxu0 0
    %624 = vmatpush1.bf16.msra.mxu0 0
    %625 = vmatprep.subr.bf16.mxu0 0
    %626 = vmatpush1.bf16.msra.mxu0 0
    %627 = vmatprep.subr.bf16.mxu0 0
    %628 = vmatpush1.bf16.msra.mxu0 0
    %629 = vmatprep.subr.bf16.mxu0 0
    %630 = vmatpush1.bf16.msra.mxu0 0
    %631 = vmatprep.subr.bf16.mxu0 0
    %632 = vmatpush1.bf16.msra.mxu0 0
    %633 = vmatprep.subr.bf16.mxu0 0
    %634 = vmatpush1.bf16.msra.mxu0 0
    %635 = vmatprep.subr.bf16.mxu0 0
    %636 = vmatpush1.bf16.msra.mxu0 0
    %637 = vmatprep.mubr.bf16.mxu0 0
    %638 = vmatmul.mubr.bf16.gmra.mrb[0].mxu0 %v533
    %v639 = vpop.f32.mrb[0].mxu0
    %v640 = vadd.f32 %v555, %v639
    %v641 = vpop.f32.mrb[0].mxu0
    %v642 = vpop.f32.mrb[0].mxu0
    %v643 = vpop.f32.mrb[0].mxu0
    %644 = vdwg.mxu0
    %v645 = vmax.f32 %v640, 0.0
    %v646 = vpack.c.bf16 %v645, %v645
    %v647 = vld [vmem:[%s7] sm:$0xf]
    %v648 = vld [vmem:[%s7 + $0x4] sm:$0xf]
    %v649 = vld [vmem:[%s7 + $0x8] sm:$0xf]
    %v650 = vld [vmem:[%s7 + $0xc] sm:$0xf]
    %v651 = vld [vmem:[%s8] sm:$0x1]
    %v653 = vlaneseq
    %v654 = vshrl.u32 %v653, 7
    %v655 = vsub.s32 0, %v654
    %v656 = vrot.slane %v651, %v655
    %v662 = vunpack.c.l.b16 %v647
    %v663 = vunpack.c.l.b16 %v648
    %v664 = vunpack.c.l.b16 %v649
    %v665 = vunpack.c.l.b16 %v650
    %v666 = vpack.c.b16 %v663, %v662
    %v667 = vpack.c.b16 %v665, %v664
    %vm670 = vcmask 261120
    %v672 = vsel %vm670, %v646, 0
    %674 = vmatprep.subr.bf16.mxu0 0
    %675 = vmatpush1.bf16.msra.mxu0 %v666
    %676 = vmatprep.subr.bf16.mxu0 0
    %677 = vmatpush1.bf16.msra.mxu0 %v667
    %678 = vmatprep.subr.bf16.mxu0 0
    %679 = vmatpush1.bf16.msra.mxu0 0
    %680 = vmatprep.subr.bf16.mxu0 0
    %681 = vmatpush1.bf16.msra.mxu0 0
    %682 = vmatprep.subr.bf16.mxu0 0
    %683 = vmatpush1.bf16.msra.mxu0 0
    %684 = vmatprep.subr.bf16.mxu0 0
    %685 = vmatpush1.bf16.msra.mxu0 0
    %686 = vmatprep.subr.bf16.mxu0 0
    %687 = vmatpush1.bf16.msra.mxu0 0
    %688 = vmatprep.subr.bf16.mxu0 0
    %689 = vmatpush1.bf16.msra.mxu0 0
    %690 = vmatprep.subr.bf16.mxu0 0
    %691 = vmatpush1.bf16.msra.mxu0 0
    %692 = vmatprep.subr.bf16.mxu0 0
    %693 = vmatpush1.bf16.msra.mxu0 0
    %694 = vmatprep.subr.bf16.mxu0 0
    %695 = vmatpush1.bf16.msra.mxu0 0
    %696 = vmatprep.subr.bf16.mxu0 0
    %697 = vmatpush1.bf16.msra.mxu0 0
    %698 = vmatprep.subr.bf16.mxu0 0
    %699 = vmatpush1.bf16.msra.mxu0 0
    %700 = vmatprep.subr.bf16.mxu0 0
    %701 = vmatpush1.bf16.msra.mxu0 0
    %702 = vmatprep.subr.bf16.mxu0 0
    %703 = vmatpush1.bf16.msra.mxu0 0
    %704 = vmatprep.subr.bf16.mxu0 0
    %705 = vmatpush1.bf16.msra.mxu0 0
    %706 = vmatprep.mubr.bf16.mxu0 0
    %707 = vmatmul.mubr.bf16.gmra.mrb[0].mxu0 %v672
    %v708 = vpop.f32.mrb[0].mxu0
    %v709 = vadd.f32 %v656, %v708
    %v710 = vpop.f32.mrb[0].mxu0
    %v711 = vpop.f32.mrb[0].mxu0
    %v712 = vpop.f32.mrb[0].mxu0
    %713 = vdwg.mxu0
    %714 = vst [vmem:[#allocation5] sm:$0xff] %v709
    // Predicated region
    $region42: #{tpu_custom_call.1} parent=1 // pred_check
      _
    $region43: #{tpu_custom_call.1} parent=1 // pred_check_branch
      %716 = sbr.rel (0) target = $region45
    $region44: #{tpu_custom_call.1} parent=1 // pred_region
      %s718 = ssub.s32 128, 128
      %719 = vsyncadd [#allocation4], %s718
      %s721 = sshll.u32 [#allocation5], 4
      %s722 = int_to_ptr.vmem [resolvable:$true] %s721
      %724 = dma.vmem_to_hbm [thread:$0]  %s722, 128, %s9, [#allocation4]
    $region45: #{tpu_custom_call.1} parent=1 // pred_fallthru
      _
    // Predicated region
    $region46: #{tpu_custom_call.1} parent=1 // pred_check
      _
    $region47: #{tpu_custom_call.1} parent=1 // pred_check_branch
      %726 = sbr.rel (0) target = $region49
    $region48: #{tpu_custom_call.1} parent=1 // pred_region
      %727 = dma.done [#allocation4], 128
    $region49: #{tpu_custom_call.1} parent=1 // pred_fallthru
      _
    %728 = vsyncpa [#allocation3], 1
    %729 = vsyncpa [#allocation4], 1

</llo_original>
